<compile_context>
chip_gen: v7x
topology: tpu7x:2x2x1
jax: 0.10.0
libtpu: 0.0.40
codegen_flags: <defaults>
</compile_context>

<pallas_src>
import functools
import math

import jax
import jax.numpy as jnp
from jax.experimental import pallas as pl
from jax.experimental.pallas import tpu as pltpu

_LANE = 128


def _round_up(x, m):
    return ((x + m - 1) // m) * m


def _mlp_bc_kernel(n_linear, x_ref, hm_ref, *refs):
    """Full MLP forward for one batch tile.

    refs = (w0, b0, w1, b1, ..., w_{L-1}, b_{L-1}, out_ref).
    x_ref:  (tb, in_pad) bf16.
    w_i:    (in_pad_i, out_pad_i) bf16.   b_i: (1, out_pad_i) f32.
    hm_ref: (1, act_pad) f32 — 0.5 at column (act_dim-1), 0 elsewhere.
    Hidden layers: ReLU (dropout = identity). Head: tanh on all but the last
    action dim, sigmoid on the last via sigmoid(x) = 0.5*tanh(0.5x) + 0.5,
    expressed with the half-mask (single EUP tanh pass).
    """
    out_ref = refs[-1]
    wb = refs[:-1]

    h = x_ref[...]                                       # bf16 (tb, in_pad)
    a = None
    for i in range(n_linear):
        w = wb[2 * i][...]                               # bf16
        b = wb[2 * i + 1][...]                           # f32 (1, out_pad)
        a = jnp.dot(h, w, preferred_element_type=jnp.float32) + b   # f32
        if i < n_linear - 1:
            # ReLU in f32 on the VPU; cast to bf16 only as the next MXU LHS.
            h = jnp.maximum(a, 0.0).astype(jnp.bfloat16)

    hm = hm_ref[...]                                     # (1, act_pad) f32
    t = jnp.tanh(a * (1.0 - hm))                         # last col scaled by .5
    # t for tanh columns; 0.5*t + 0.5 (== sigmoid) for the last action column.
    out_ref[...] = (t + hm * (1.0 - t)).astype(out_ref.dtype)


class MLPBCModelPallas:
    """JAX/Pallas re-implementation of the PyTorch MLPBCModel forward pass."""

    def __init__(self, state_dim, act_dim, hidden_size, n_layer,
                 dropout=0.1, max_length=1, seed=0):
        self.state_dim = state_dim
        self.act_dim = act_dim
        self.hidden_size = hidden_size
        self.n_layer = n_layer
        self.max_length = max_length
        self.in_dim = max_length * state_dim

        dims = [self.in_dim] + [hidden_size] * n_layer + [act_dim]
        self._dims = dims
        self._pad_dims = [_round_up(d, _LANE) for d in dims]

        # Head half-mask: 0.5 at the (sigmoid) last action column, else 0.
        act_pad = self._pad_dims[-1]
        self._half_mask = (jnp.zeros((1, act_pad), jnp.float32)
                           .at[0, act_dim - 1].set(0.5))

        # Deterministic init matching nn.Linear shapes (weights kept as (in, out)).
        key = jax.random.PRNGKey(seed)
        weights, biases = [], []
        for i in range(len(dims) - 1):
            fan_in, fan_out = dims[i], dims[i + 1]
            key, kw, kb = jax.random.split(key, 3)
            bound = 1.0 / math.sqrt(fan_in)
            w = jax.random.uniform(kw, (fan_in, fan_out), jnp.float32,
                                   minval=-bound, maxval=bound)
            b = jax.random.uniform(kb, (fan_out,), jnp.float32,
                                   minval=-bound, maxval=bound)
            weights.append(w)
            biases.append(b)
        self._store_params(weights, biases)

        # Single jitted forward: slice/reshape -> pad -> pallas_call -> slice.
        self._forward_fn = jax.jit(self._make_forward_fn())

    # ----------------------------------------------------------------- params
    def _store_params(self, weights, biases):
        """Zero-pad to lane multiples; weights -> bf16 (MXU), biases stay f32."""
        self.weights, self.biases = [], []
        for i, (w, b) in enumerate(zip(weights, biases)):
            in_pad, out_pad = self._pad_dims[i], self._pad_dims[i + 1]
            wp = jnp.zeros((in_pad, out_pad), jnp.float32)
            wp = wp.at[:w.shape[0], :w.shape[1]].set(w)
            bp = jnp.zeros((1, out_pad), jnp.float32)
            bp = bp.at[0, :b.shape[0]].set(b)
            self.weights.append(wp.astype(jnp.bfloat16))
            self.biases.append(bp)
        self._flat_params = []
        for w, b in zip(self.weights, self.biases):
            self._flat_params.extend([w, b])

    def set_params(self, torch_weights, torch_biases):
        """Inject trained nn.Linear params: weight_i (out,in), bias_i (out,)."""
        ws = [jnp.asarray(w, jnp.float32).T for w in torch_weights]
        bs = [jnp.asarray(b, jnp.float32) for b in torch_biases]
        self._store_params(ws, bs)

    # ---------------------------------------------------------------- forward
    def _make_forward_fn(self):
        act_dim = self.act_dim
        max_length = self.max_length
        in_dim = self.in_dim
        in_pad = self._pad_dims[0]
        act_pad = self._pad_dims[-1]
        n_linear = len(self._dims) - 1

        kernel = functools.partial(_mlp_bc_kernel, n_linear)

        def fwd(states, half_mask, *flat_params):
            B = states.shape[0]
            # states[:, -max_length:].reshape(B, -1), cast to bf16 (the first
            # matmul truncates to bf16 anyway) to halve the x-stream DMA.
            x = states[:, -max_length:].reshape(B, in_dim).astype(jnp.bfloat16)

            # ---- batch tiling (all python ints; shapes are static under jit)
            b16 = _round_up(B, 16)           # 16 sublanes for bf16 packing
            if b16 <= 512:
                tb = b16                     # single tile for small batches
            else:
                # >= 2 grid steps so both v7x TensorCores get work; tiles up
                # to 1024 rows amortize the ~0.35us per-grid-step overhead.
                tb = min(1024, _round_up((b16 + 1) // 2, 256))
            b_pad = _round_up(b16, tb)
            grid = (b_pad // tb,)

            x = jnp.pad(x, ((0, b_pad - B), (0, in_pad - in_dim)))

            # x / out tiles move per grid step -> auto double-buffered DMA.
            # Weights / biases / mask use constant index_maps -> fetched once,
            # VMEM-resident across all grid steps.
            in_specs = [pl.BlockSpec((tb, in_pad), lambda i: (i, 0)),
                        pl.BlockSpec((1, act_pad), lambda i: (0, 0))]
            for p in flat_params:
                in_specs.append(pl.BlockSpec(p.shape, lambda i: (0, 0)))
            out_spec = pl.BlockSpec((tb, act_pad), lambda i: (i, 0))

            # Tight VMEM request (actual dtypes) + headroom for spills and
            # per-layer f32 intermediates; well under every generation's VMEM.
            param_bytes = sum(int(p.size) * p.dtype.itemsize
                              for p in flat_params)
            buf_bytes = (2 * tb * in_pad * 2        # x double buffer (bf16)
                         + 2 * tb * act_pad * 4     # out double buffer (f32)
                         + 2 * param_bytes          # resident weights/biases
                         + 2 * act_pad * 4)         # head mask
            vmem_bytes = min(48 << 20, buf_bytes + (12 << 20))

            out = pl.pallas_call(
                kernel,
                out_shape=jax.ShapeDtypeStruct((b_pad, act_pad), jnp.float32),
                grid=grid,
                in_specs=in_specs,
                out_specs=out_spec,
                compiler_params=pltpu.CompilerParams(
                    # Batch tiles are independent -> megacore-shardable.
                    dimension_semantics=("parallel",),
                    vmem_limit_bytes=int(vmem_bytes)),
            )(x, half_mask, *flat_params)

            return out[:B, :act_dim].reshape(B, 1, act_dim)

        return fwd

    def forward(self, states, actions=None, rewards=None,
                attention_mask=None, target_return=None):
        acts = self._forward_fn(jnp.asarray(states, jnp.float32),
                                self._half_mask, *self._flat_params)
        return (None, acts, None)

    def get_action(self, states, actions=None, rewards=None,
                   target_return=None, timesteps=None, **kwargs):
        states = jnp.asarray(states, jnp.float32).reshape(1, -1, self.state_dim)
        if states.shape[1] < self.max_length:
            pad = jnp.zeros((1, self.max_length - states.shape[1],
                             self.state_dim), dtype=jnp.float32)
            states = jnp.concatenate([pad, states], axis=1)
        _, acts, _ = self.forward(states)
        return acts[0, -1]


if __name__ == "__main__":
    # Small, deterministic example shapes.
    B, T = 2, 8
    state_dim, act_dim, hidden_size, n_layer, max_length = 16, 4, 32, 3, 1

    model = MLPBCModelPallas(state_dim, act_dim, hidden_size, n_layer,
                             dropout=0.1, max_length=max_length, seed=0)

    key = jax.random.PRNGKey(0)
    k_s, k_a, k_r = jax.random.split(key, 3)
    states = jax.random.normal(k_s, (B, T, state_dim), dtype=jnp.float32)
    actions = jax.random.normal(k_a, (B, T, act_dim), dtype=jnp.float32)
    rewards = jax.random.normal(k_r, (B, T, 1), dtype=jnp.float32)

    _, pred_actions, _ = model.forward(states, actions, rewards)
    pred_actions = jax.block_until_ready(pred_actions)

    assert pred_actions.shape == (B, 1, act_dim)
    # tanh outputs in [-1, 1], sigmoid output in [0, 1] — quick sanity check.
    assert bool(jnp.all(jnp.abs(pred_actions[:, :, :-1]) <= 1.0))
    assert bool(jnp.all((pred_actions[:, :, -1] >= 0.0)
                        & (pred_actions[:, :, -1] <= 1.0)))

    # Pure-JAX reference using the same padded bf16 params / f32 accumulation.
    def ref_forward(s):
        x = s[:, -max_length:].reshape(B, -1).astype(jnp.bfloat16)
        x = jnp.pad(x, ((0, 0), (0, model._pad_dims[0] - x.shape[1])))
        h = x
        a = None
        for i, (w, b) in enumerate(zip(model.weights, model.biases)):
            a = jnp.dot(h, w, preferred_element_type=jnp.float32) + b
            if i < len(model.weights) - 1:
                h = jnp.maximum(a, 0.0).astype(jnp.bfloat16)
        a = a[:, :act_dim]
        out = jnp.concatenate([jnp.tanh(a[:, :-1]),
                               jax.nn.sigmoid(a[:, -1:])], axis=-1)
        return out.reshape(B, 1, act_dim)

    ref = jax.block_until_ready(ref_forward(states))
    assert bool(jnp.allclose(pred_actions, ref, atol=1e-4, rtol=1e-4))

    print("KERNEL_OK")
</pallas_src>

<mosaic_0001>
module attributes {stable_mosaic.version = 11 : i64} {
  func.func @_mlp_bc_kernel(%arg0: i32, %arg1: memref<16x128xbf16, #tpu.memory_space<vmem>>, %arg2: memref<1x128xf32, #tpu.memory_space<vmem>>, %arg3: memref<128x128xbf16, #tpu.memory_space<vmem>>, %arg4: memref<1x128xf32, #tpu.memory_space<vmem>>, %arg5: memref<128x128xbf16, #tpu.memory_space<vmem>>, %arg6: memref<1x128xf32, #tpu.memory_space<vmem>>, %arg7: memref<128x128xbf16, #tpu.memory_space<vmem>>, %arg8: memref<1x128xf32, #tpu.memory_space<vmem>>, %arg9: memref<128x128xbf16, #tpu.memory_space<vmem>>, %arg10: memref<1x128xf32, #tpu.memory_space<vmem>>, %arg11: memref<16x128xf32, #tpu.memory_space<vmem>>) attributes {dimension_semantics = [#tpu.dimension_semantics<parallel>], iteration_bounds = array<i64: 1>, scalar_prefetch = 0 : i64, scratch_operands = 0 : i64, tpu.core_type = #tpu.core_type<tc>, window_params = [{transform_indices = @transform_0, window_bounds = array<i64: 16, 128>}, {pipeline_mode = #tpu.pipeline_mode<synchronous>, transform_indices = @transform_1, window_bounds = array<i64: 1, 128>}, {pipeline_mode = #tpu.pipeline_mode<synchronous>, transform_indices = @transform_2, window_bounds = array<i64: 128, 128>}, {pipeline_mode = #tpu.pipeline_mode<synchronous>, transform_indices = @transform_3, window_bounds = array<i64: 1, 128>}, {pipeline_mode = #tpu.pipeline_mode<synchronous>, transform_indices = @transform_4, window_bounds = array<i64: 128, 128>}, {pipeline_mode = #tpu.pipeline_mode<synchronous>, transform_indices = @transform_5, window_bounds = array<i64: 1, 128>}, {pipeline_mode = #tpu.pipeline_mode<synchronous>, transform_indices = @transform_6, window_bounds = array<i64: 128, 128>}, {pipeline_mode = #tpu.pipeline_mode<synchronous>, transform_indices = @transform_7, window_bounds = array<i64: 1, 128>}, {pipeline_mode = #tpu.pipeline_mode<synchronous>, transform_indices = @transform_8, window_bounds = array<i64: 128, 128>}, {pipeline_mode = #tpu.pipeline_mode<synchronous>, transform_indices = @transform_9, window_bounds = array<i64: 1, 128>}, {transform_indices = @transform_10, window_bounds = array<i64: 16, 128>}]} {
    %c0 = arith.constant 0 : index
    %c0_0 = arith.constant 0 : index
    %0 = vector.load %arg1[%c0, %c0_0] : memref<16x128xbf16, #tpu.memory_space<vmem>>, vector<16x128xbf16>
    %c0_1 = arith.constant 0 : index
    %c0_2 = arith.constant 0 : index
    %1 = vector.load %arg3[%c0_1, %c0_2] : memref<128x128xbf16, #tpu.memory_space<vmem>>, vector<128x128xbf16>
    %c0_3 = arith.constant 0 : index
    %c0_4 = arith.constant 0 : index
    %2 = vector.load %arg4[%c0_3, %c0_4] : memref<1x128xf32, #tpu.memory_space<vmem>>, vector<1x128xf32>
    %cst = arith.constant dense<0.000000e+00> : vector<16x128xf32>
    %3 = tpu.matmul %0, %1, %cst {dimension_numbers = #tpu.dot_dimension_numbers<[1], [0], [0], [1], [0, 0, 1, 1], [], []>} : vector<16x128xbf16>, vector<128x128xbf16>, vector<16x128xf32> -> vector<16x128xf32>
    %4 = vector.broadcast %2 : vector<1x128xf32> to vector<16x128xf32>
    %5 = arith.addf %3, %4 : vector<16x128xf32>
    %cst_5 = arith.constant 0.000000e+00 : f32
    %6 = vector.broadcast %cst_5 : f32 to vector<16x128xf32>
    %7 = arith.maximumf %5, %6 : vector<16x128xf32>
    %8 = arith.truncf %7 : vector<16x128xf32> to vector<16x128xbf16>
    %c0_6 = arith.constant 0 : index
    %c0_7 = arith.constant 0 : index
    %9 = vector.load %arg5[%c0_6, %c0_7] : memref<128x128xbf16, #tpu.memory_space<vmem>>, vector<128x128xbf16>
    %c0_8 = arith.constant 0 : index
    %c0_9 = arith.constant 0 : index
    %10 = vector.load %arg6[%c0_8, %c0_9] : memref<1x128xf32, #tpu.memory_space<vmem>>, vector<1x128xf32>
    %cst_10 = arith.constant dense<0.000000e+00> : vector<16x128xf32>
    %11 = tpu.matmul %8, %9, %cst_10 {dimension_numbers = #tpu.dot_dimension_numbers<[1], [0], [0], [1], [0, 0, 1, 1], [], []>} : vector<16x128xbf16>, vector<128x128xbf16>, vector<16x128xf32> -> vector<16x128xf32>
    %12 = vector.broadcast %10 : vector<1x128xf32> to vector<16x128xf32>
    %13 = arith.addf %11, %12 : vector<16x128xf32>
    %cst_11 = arith.constant 0.000000e+00 : f32
    %14 = vector.broadcast %cst_11 : f32 to vector<16x128xf32>
    %15 = arith.maximumf %13, %14 : vector<16x128xf32>
    %16 = arith.truncf %15 : vector<16x128xf32> to vector<16x128xbf16>
    %c0_12 = arith.constant 0 : index
    %c0_13 = arith.constant 0 : index
    %17 = vector.load %arg7[%c0_12, %c0_13] : memref<128x128xbf16, #tpu.memory_space<vmem>>, vector<128x128xbf16>
    %c0_14 = arith.constant 0 : index
    %c0_15 = arith.constant 0 : index
    %18 = vector.load %arg8[%c0_14, %c0_15] : memref<1x128xf32, #tpu.memory_space<vmem>>, vector<1x128xf32>
    %cst_16 = arith.constant dense<0.000000e+00> : vector<16x128xf32>
    %19 = tpu.matmul %16, %17, %cst_16 {dimension_numbers = #tpu.dot_dimension_numbers<[1], [0], [0], [1], [0, 0, 1, 1], [], []>} : vector<16x128xbf16>, vector<128x128xbf16>, vector<16x128xf32> -> vector<16x128xf32>
    %20 = vector.broadcast %18 : vector<1x128xf32> to vector<16x128xf32>
    %21 = arith.addf %19, %20 : vector<16x128xf32>
    %cst_17 = arith.constant 0.000000e+00 : f32
    %22 = vector.broadcast %cst_17 : f32 to vector<16x128xf32>
    %23 = arith.maximumf %21, %22 : vector<16x128xf32>
    %24 = arith.truncf %23 : vector<16x128xf32> to vector<16x128xbf16>
    %c0_18 = arith.constant 0 : index
    %c0_19 = arith.constant 0 : index
    %25 = vector.load %arg9[%c0_18, %c0_19] : memref<128x128xbf16, #tpu.memory_space<vmem>>, vector<128x128xbf16>
    %c0_20 = arith.constant 0 : index
    %c0_21 = arith.constant 0 : index
    %26 = vector.load %arg10[%c0_20, %c0_21] : memref<1x128xf32, #tpu.memory_space<vmem>>, vector<1x128xf32>
    %cst_22 = arith.constant dense<0.000000e+00> : vector<16x128xf32>
    %27 = tpu.matmul %24, %25, %cst_22 {dimension_numbers = #tpu.dot_dimension_numbers<[1], [0], [0], [1], [0, 0, 1, 1], [], []>} : vector<16x128xbf16>, vector<128x128xbf16>, vector<16x128xf32> -> vector<16x128xf32>
    %28 = vector.broadcast %26 : vector<1x128xf32> to vector<16x128xf32>
    %29 = arith.addf %27, %28 : vector<16x128xf32>
    %c0_23 = arith.constant 0 : index
    %c0_24 = arith.constant 0 : index
    %30 = vector.load %arg2[%c0_23, %c0_24] : memref<1x128xf32, #tpu.memory_space<vmem>>, vector<1x128xf32>
    %cst_25 = arith.constant 1.000000e+00 : f32
    %31 = vector.broadcast %cst_25 : f32 to vector<1x128xf32>
    %32 = arith.subf %31, %30 : vector<1x128xf32>
    %33 = vector.broadcast %32 : vector<1x128xf32> to vector<16x128xf32>
    %34 = arith.mulf %29, %33 : vector<16x128xf32>
    %35 = math.tanh %34 : vector<16x128xf32>
    %cst_26 = arith.constant 1.000000e+00 : f32
    %36 = vector.broadcast %cst_26 : f32 to vector<16x128xf32>
    %37 = arith.subf %36, %35 : vector<16x128xf32>
    %38 = vector.broadcast %30 : vector<1x128xf32> to vector<16x128xf32>
    %39 = arith.mulf %38, %37 : vector<16x128xf32>
    %40 = arith.addf %35, %39 : vector<16x128xf32>
    %c0_27 = arith.constant 0 : index
    %c0_28 = arith.constant 0 : index
    %41 = vector.load %arg11[%c0_27, %c0_28] : memref<16x128xf32, #tpu.memory_space<vmem>>, vector<16x128xf32>
    tpu.vector_store %arg11[%c0_27, %c0_28], %40 {strides = array<i32>} : memref<16x128xf32, #tpu.memory_space<vmem>>, vector<16x128xf32>,
    return
  }
  func.func @transform_0(%arg0: i32) -> (i32, i32) {
    %c0_i32 = arith.constant 0 : i32
    %c0_i32_0 = arith.constant 0 : i32
    return %arg0, %c0_i32 : i32, i32
  }
  func.func @transform_1(%arg0: i32) -> (i32, i32) {
    %c0_i32 = arith.constant 0 : i32
    %c0_i32_0 = arith.constant 0 : i32
    %c0_i32_1 = arith.constant 0 : i32
    return %c0_i32, %c0_i32_0 : i32, i32
  }
  func.func @transform_2(%arg0: i32) -> (i32, i32) {
    %c0_i32 = arith.constant 0 : i32
    %c0_i32_0 = arith.constant 0 : i32
    %c0_i32_1 = arith.constant 0 : i32
    return %c0_i32, %c0_i32_0 : i32, i32
  }
  func.func @transform_3(%arg0: i32) -> (i32, i32) {
    %c0_i32 = arith.constant 0 : i32
    %c0_i32_0 = arith.constant 0 : i32
    %c0_i32_1 = arith.constant 0 : i32
    return %c0_i32, %c0_i32_0 : i32, i32
  }
  func.func @transform_4(%arg0: i32) -> (i32, i32) {
    %c0_i32 = arith.constant 0 : i32
    %c0_i32_0 = arith.constant 0 : i32
    %c0_i32_1 = arith.constant 0 : i32
    return %c0_i32, %c0_i32_0 : i32, i32
  }
  func.func @transform_5(%arg0: i32) -> (i32, i32) {
    %c0_i32 = arith.constant 0 : i32
    %c0_i32_0 = arith.constant 0 : i32
    %c0_i32_1 = arith.constant 0 : i32
    return %c0_i32, %c0_i32_0 : i32, i32
  }
  func.func @transform_6(%arg0: i32) -> (i32, i32) {
    %c0_i32 = arith.constant 0 : i32
    %c0_i32_0 = arith.constant 0 : i32
    %c0_i32_1 = arith.constant 0 : i32
    return %c0_i32, %c0_i32_0 : i32, i32
  }
  func.func @transform_7(%arg0: i32) -> (i32, i32) {
    %c0_i32 = arith.constant 0 : i32
    %c0_i32_0 = arith.constant 0 : i32
    %c0_i32_1 = arith.constant 0 : i32
    return %c0_i32, %c0_i32_0 : i32, i32
  }
  func.func @transform_8(%arg0: i32) -> (i32, i32) {
    %c0_i32 = arith.constant 0 : i32
    %c0_i32_0 = arith.constant 0 : i32
    %c0_i32_1 = arith.constant 0 : i32
    return %c0_i32, %c0_i32_0 : i32, i32
  }
  func.func @transform_9(%arg0: i32) -> (i32, i32) {
    %c0_i32 = arith.constant 0 : i32
    %c0_i32_0 = arith.constant 0 : i32
    %c0_i32_1 = arith.constant 0 : i32
    return %c0_i32, %c0_i32_0 : i32, i32
  }
  func.func @transform_10(%arg0: i32) -> (i32, i32) {
    %c0_i32 = arith.constant 0 : i32
    %c0_i32_0 = arith.constant 0 : i32
    return %arg0, %c0_i32 : i32, i32
  }
}

</mosaic_0001>

<llo_original>
// kernel: fwd.1
$region0: #{fwd.1}
  #allocation0 [shape = 'u32[]', space=smem, size = 0x4, offset = 0x4, fixed_abs, tag = 'smem constant byte address 0x4 - core index']
  #allocation1 [shape = 'u32[144,128]{1,0:T(1,128)}', space=vmem, size = 0x12000, scoped, tag = 'internal scratch']
  %s0 = inlined_call_operand.vmem [shape: bf16[16,128], index: 0, kind: input, shape index: {}]
  %s1 = inlined_call_operand.vmem [shape: f32[1,128], index: 1, kind: input, shape index: {}]
  %s2 = inlined_call_operand.hbm [shape: bf16[128,128], index: 2, kind: input, shape index: {}]
  %s3 = inlined_call_operand.vmem [shape: f32[1,128], index: 3, kind: input, shape index: {}]
  %s4 = inlined_call_operand.hbm [shape: bf16[128,128], index: 4, kind: input, shape index: {}]
  %s5 = inlined_call_operand.vmem [shape: f32[1,128], index: 5, kind: input, shape index: {}]
  %s6 = inlined_call_operand.hbm [shape: bf16[128,128], index: 6, kind: input, shape index: {}]
  %s7 = inlined_call_operand.vmem [shape: f32[1,128], index: 7, kind: input, shape index: {}]
  %s8 = inlined_call_operand.hbm [shape: bf16[128,128], index: 8, kind: input, shape index: {}]
  %s9 = inlined_call_operand.vmem [shape: f32[1,128], index: 9, kind: input, shape index: {}]
  %s10 = inlined_call_operand.vmem [shape: f32[16,128], index: 10, kind: output, shape index: {}]
  %s11 = sld [smem:[#allocation0]]
  $region66: #{fwd.1} parent=0
    _
  %s13 = ssub.s32 1, %s11
  %s14 = scalar_select 0, %s13, %s11
  $region1: #{fwd.1} parent=0
    #allocation2 [shape = 'u8[32768]{0}', space=vmem, size = 0x8000, scoped, tag = 'input window, operand 2, single buffered']
    #allocation3 [shape = 's32[1]{0}', space=sflag, size = 0x4, scoped, tag = 'scoped memory for fwd.1']
    #allocation4 [shape = 'u8[32768]{0}', space=vmem, size = 0x8000, scoped, tag = 'input window, operand 4, single buffered']
    #allocation5 [shape = 's32[1]{0}', space=sflag, size = 0x4, scoped, tag = 'scoped memory for fwd.1']
    #allocation6 [shape = 'u8[32768]{0}', space=vmem, size = 0x8000, scoped, tag = 'input window, operand 6, single buffered']
    #allocation7 [shape = 'u8[32768]{0}', space=vmem, size = 0x8000, scoped, tag = 'input window, operand 8, single buffered']
    #allocation8 [shape = 's32[1]{0}', space=sflag, size = 0x4, scoped, tag = 'scoped memory for fwd.1']
    %15 = vsyncpa [#allocation3], 0
    %16 = vsyncpa [#allocation5], 0
    %17 = vsyncpa [#allocation8], 0
    // Predicated region
    $region2: #{fwd.1} parent=1 // pred_check
      _
    $region3: #{fwd.1} parent=1 // pred_check_branch
      %19 = sbr.rel (0) target = $region5
    $region4: #{fwd.1} parent=1 // pred_region
      _
    $region5: #{fwd.1} parent=1 // pred_fallthru
      _
    // Predicated region
    $region6: #{fwd.1} parent=1 // pred_check
      _
    $region7: #{fwd.1} parent=1 // pred_check_branch
      %21 = sbr.rel (0) target = $region9
    $region8: #{fwd.1} parent=1 // pred_region
      _
    $region9: #{fwd.1} parent=1 // pred_fallthru
      _
    // Predicated region
    $region10: #{fwd.1} parent=1 // pred_check
      _
    $region11: #{fwd.1} parent=1 // pred_check_branch
      %23 = sbr.rel (0) target = $region13
    $region12: #{fwd.1} parent=1 // pred_region
      %s25 = ssub.s32 1024, 1024
      %26 = vsyncadd [#allocation3], %s25
      %s27 = sshll.u32 [#allocation2], 4
      %s28 = int_to_ptr.vmem [resolvable:$true] %s27
      %33 = dma.hbm_to_vmem [thread:$0]  %s2, 1024, %s28, [#allocation3], 64, 64, 4
    $region13: #{fwd.1} parent=1 // pred_fallthru
      _
    // Predicated region
    $region14: #{fwd.1} parent=1 // pred_check
      _
    $region15: #{fwd.1} parent=1 // pred_check_branch
      %35 = sbr.rel (0) target = $region17
    $region16: #{fwd.1} parent=1 // pred_region
      _
    $region17: #{fwd.1} parent=1 // pred_fallthru
      _
    // Predicated region
    $region18: #{fwd.1} parent=1 // pred_check
      _
    $region19: #{fwd.1} parent=1 // pred_check_branch
      %37 = sbr.rel (0) target = $region21
    $region20: #{fwd.1} parent=1 // pred_region
      %s39 = ssub.s32 1024, 1024
      %40 = vsyncadd [#allocation5], %s39
      %s41 = sshll.u32 [#allocation4], 4
      %s42 = int_to_ptr.vmem [resolvable:$true] %s41
      %47 = dma.hbm_to_vmem [thread:$0]  %s4, 1024, %s42, [#allocation5], 64, 64, 4
    $region21: #{fwd.1} parent=1 // pred_fallthru
      _
    // Predicated region
    $region22: #{fwd.1} parent=1 // pred_check
      _
    $region23: #{fwd.1} parent=1 // pred_check_branch
      %49 = sbr.rel (0) target = $region25
    $region24: #{fwd.1} parent=1 // pred_region
      _
    $region25: #{fwd.1} parent=1 // pred_fallthru
      _
    // Predicated region
    $region26: #{fwd.1} parent=1 // pred_check
      _
    $region27: #{fwd.1} parent=1 // pred_check_branch
      %51 = sbr.rel (0) target = $region29
    $region28: #{fwd.1} parent=1 // pred_region
      %s53 = ssub.s32 1024, 1024
      %54 = vsyncadd [#allocation5], %s53
      %s55 = sshll.u32 [#allocation6], 4
      %s56 = int_to_ptr.vmem [resolvable:$true] %s55
      %61 = dma.hbm_to_vmem [thread:$0]  %s6, 1024, %s56, [#allocation5], 64, 64, 4
    $region29: #{fwd.1} parent=1 // pred_fallthru
      _
    // Predicated region
    $region30: #{fwd.1} parent=1 // pred_check
      _
    $region31: #{fwd.1} parent=1 // pred_check_branch
      %63 = sbr.rel (0) target = $region33
    $region32: #{fwd.1} parent=1 // pred_region
      _
    $region33: #{fwd.1} parent=1 // pred_fallthru
      _
    // Predicated region
    $region34: #{fwd.1} parent=1 // pred_check
      _
    $region35: #{fwd.1} parent=1 // pred_check_branch
      %65 = sbr.rel (0) target = $region37
    $region36: #{fwd.1} parent=1 // pred_region
      %s67 = ssub.s32 1024, 1024
      %68 = vsyncadd [#allocation8], %s67
      %s69 = sshll.u32 [#allocation7], 4
      %s70 = int_to_ptr.vmem [resolvable:$true] %s69
      %75 = dma.hbm_to_vmem [thread:$0]  %s8, 1024, %s70, [#allocation8], 64, 64, 4
    $region37: #{fwd.1} parent=1 // pred_fallthru
      _
    // Predicated region
    $region38: #{fwd.1} parent=1 // pred_check
      _
    $region39: #{fwd.1} parent=1 // pred_check_branch
      %77 = sbr.rel (0) target = $region41
    $region40: #{fwd.1} parent=1 // pred_region
      _
    $region41: #{fwd.1} parent=1 // pred_fallthru
      _
    // Predicated region
    $region42: #{fwd.1} parent=1 // pred_check
      _
    $region43: #{fwd.1} parent=1 // pred_check_branch
      %79 = sbr.rel (0) target = $region45
    $region44: #{fwd.1} parent=1 // pred_region
      %80 = dma.done [#allocation3], 1024
    $region45: #{fwd.1} parent=1 // pred_fallthru
      _
    // Predicated region
    $region46: #{fwd.1} parent=1 // pred_check
      _
    $region47: #{fwd.1} parent=1 // pred_check_branch
      %82 = sbr.rel (0) target = $region49
    $region48: #{fwd.1} parent=1 // pred_region
      %83 = dma.done [#allocation5], 1024
    $region49: #{fwd.1} parent=1 // pred_fallthru
      _
    // Predicated region
    $region50: #{fwd.1} parent=1 // pred_check
      _
    $region51: #{fwd.1} parent=1 // pred_check_branch
      %85 = sbr.rel (0) target = $region53
    $region52: #{fwd.1} parent=1 // pred_region
      %86 = dma.done [#allocation5], 1024
    $region53: #{fwd.1} parent=1 // pred_fallthru
      _
    // Predicated region
    $region54: #{fwd.1} parent=1 // pred_check
      _
    $region55: #{fwd.1} parent=1 // pred_check_branch
      %88 = sbr.rel (0) target = $region57
    $region56: #{fwd.1} parent=1 // pred_region
      %89 = dma.done [#allocation8], 1024
    $region57: #{fwd.1} parent=1 // pred_fallthru
      _
    %v91 = vld [vmem:[%s0] sm:$0xf]
    %v92 = vld [vmem:[%s0 + $0x4] sm:$0xf]
    %v93 = vld [vmem:[#allocation2] sm:$0xf]
    %v94 = vld [vmem:[#allocation2 + $0x4] sm:$0xf]
    %v95 = vld [vmem:[#allocation2 + $0x8] sm:$0xf]
    %v96 = vld [vmem:[#allocation2 + $0xc] sm:$0xf]
    %v97 = vld [vmem:[#allocation2 + $0x10] sm:$0xf]
    %v98 = vld [vmem:[#allocation2 + $0x14] sm:$0xf]
    %v99 = vld [vmem:[#allocation2 + $0x18] sm:$0xf]
    %v100 = vld [vmem:[#allocation2 + $0x1c] sm:$0xf]
    %v101 = vld [vmem:[#allocation2 + $0x20] sm:$0xf]
    %v102 = vld [vmem:[#allocation2 + $0x24] sm:$0xf]
    %v103 = vld [vmem:[#allocation2 + $0x28] sm:$0xf]
    %v104 = vld [vmem:[#allocation2 + $0x2c] sm:$0xf]
    %v105 = vld [vmem:[#allocation2 + $0x30] sm:$0xf]
    %v106 = vld [vmem:[#allocation2 + $0x34] sm:$0xf]
    %v107 = vld [vmem:[#allocation2 + $0x38] sm:$0xf]
    %v108 = vld [vmem:[#allocation2 + $0x3c] sm:$0xf]
    %v109 = vld [vmem:[%s3] sm:$0x1]
    %v111 = vlaneseq
    %v112 = vshrl.u32 %v111, 7
    %v113 = vsub.s32 0, %v112
    %v114 = vrot.slane %v109, %v113
    %v118 = vunpack.c.l.b16 %v91
    %v119 = vunpack.c.l.b16 %v92
    %v120 = vpack.c.b16 %v119, %v118
    %v138 = vunpack.c.l.b16 %v93
    %v139 = vunpack.c.l.b16 %v94
    %v140 = vunpack.c.l.b16 %v95
    %v141 = vunpack.c.l.b16 %v96
    %v142 = vunpack.c.l.b16 %v97
    %v143 = vunpack.c.l.b16 %v98
    %v144 = vunpack.c.l.b16 %v99
    %v145 = vunpack.c.l.b16 %v100
    %v146 = vunpack.c.l.b16 %v101
    %v147 = vunpack.c.l.b16 %v102
    %v148 = vunpack.c.l.b16 %v103
    %v149 = vunpack.c.l.b16 %v104
    %v150 = vunpack.c.l.b16 %v105
    %v151 = vunpack.c.l.b16 %v106
    %v152 = vunpack.c.l.b16 %v107
    %v153 = vunpack.c.l.b16 %v108
    %v154 = vpack.c.b16 %v139, %v138
    %v155 = vpack.c.b16 %v141, %v140
    %v156 = vpack.c.b16 %v143, %v142
    %v157 = vpack.c.b16 %v145, %v144
    %v158 = vpack.c.b16 %v147, %v146
    %v159 = vpack.c.b16 %v149, %v148
    %v160 = vpack.c.b16 %v151, %v150
    %v161 = vpack.c.b16 %v153, %v152
    %170 = vmatprep.subr.bf16.mxu0 0
    %171 = vmatpush1.bf16.msra.mxu0 %v154
    %172 = vmatprep.subr.bf16.mxu0 0
    %173 = vmatpush1.bf16.msra.mxu0 %v155
    %174 = vmatprep.subr.bf16.mxu0 0
    %175 = vmatpush1.bf16.msra.mxu0 %v156
    %176 = vmatprep.subr.bf16.mxu0 0
    %177 = vmatpush1.bf16.msra.mxu0 %v157
    %178 = vmatprep.subr.bf16.mxu0 0
    %179 = vmatpush1.bf16.msra.mxu0 %v158
    %180 = vmatprep.subr.bf16.mxu0 0
    %181 = vmatpush1.bf16.msra.mxu0 %v159
    %182 = vmatprep.subr.bf16.mxu0 0
    %183 = vmatpush1.bf16.msra.mxu0 %v160
    %184 = vmatprep.subr.bf16.mxu0 0
    %185 = vmatpush1.bf16.msra.mxu0 %v161
    %186 = vmatprep.subr.bf16.mxu0 0
    %187 = vmatpush1.bf16.msra.mxu0 0
    %188 = vmatprep.subr.bf16.mxu0 0
    %189 = vmatpush1.bf16.msra.mxu0 0
    %190 = vmatprep.subr.bf16.mxu0 0
    %191 = vmatpush1.bf16.msra.mxu0 0
    %192 = vmatprep.subr.bf16.mxu0 0
    %193 = vmatpush1.bf16.msra.mxu0 0
    %194 = vmatprep.subr.bf16.mxu0 0
    %195 = vmatpush1.bf16.msra.mxu0 0
    %196 = vmatprep.subr.bf16.mxu0 0
    %197 = vmatpush1.bf16.msra.mxu0 0
    %198 = vmatprep.subr.bf16.mxu0 0
    %199 = vmatpush1.bf16.msra.mxu0 0
    %200 = vmatprep.subr.bf16.mxu0 0
    %201 = vmatpush1.bf16.msra.mxu0 0
    %202 = vmatprep.mubr.bf16.mxu0 0
    %203 = vmatmul.mubr.bf16.gmra.mrb[0].mxu0 %v120
    %v204 = vpop.f32.mrb[0].mxu0
    %v205 = vadd.f32 %v114, %v204
    %v206 = vpop.f32.mrb[0].mxu0
    %v207 = vpop.f32.mrb[0].mxu0
    %v208 = vadd.f32 %v114, %v207
    %v209 = vpop.f32.mrb[0].mxu0
    %210 = vdwg.mxu0
    %v211 = vmax.f32 %v205, 0.0
    %v212 = vmax.f32 %v208, 0.0
    %v213 = vpack.c.bf16 %v212, %v211
    %v214 = vld [vmem:[#allocation4] sm:$0xf]
    %v215 = vld [vmem:[#allocation4 + $0x4] sm:$0xf]
    %v216 = vld [vmem:[#allocation4 + $0x8] sm:$0xf]
    %v217 = vld [vmem:[#allocation4 + $0xc] sm:$0xf]
    %v218 = vld [vmem:[#allocation4 + $0x10] sm:$0xf]
    %v219 = vld [vmem:[#allocation4 + $0x14] sm:$0xf]
    %v220 = vld [vmem:[#allocation4 + $0x18] sm:$0xf]
    %v221 = vld [vmem:[#allocation4 + $0x1c] sm:$0xf]
    %v222 = vld [vmem:[#allocation4 + $0x20] sm:$0xf]
    %v223 = vld [vmem:[#allocation4 + $0x24] sm:$0xf]
    %v224 = vld [vmem:[#allocation4 + $0x28] sm:$0xf]
    %v225 = vld [vmem:[#allocation4 + $0x2c] sm:$0xf]
    %v226 = vld [vmem:[#allocation4 + $0x30] sm:$0xf]
    %v227 = vld [vmem:[#allocation4 + $0x34] sm:$0xf]
    %v228 = vld [vmem:[#allocation4 + $0x38] sm:$0xf]
    %v229 = vld [vmem:[#allocation4 + $0x3c] sm:$0xf]
    %v230 = vld [vmem:[%s5] sm:$0x1]
    %v232 = vlaneseq
    %v233 = vshrl.u32 %v232, 7
    %v234 = vsub.s32 0, %v233
    %v235 = vrot.slane %v230, %v234
    %v253 = vunpack.c.l.b16 %v214
    %v254 = vunpack.c.l.b16 %v215
    %v255 = vunpack.c.l.b16 %v216
    %v256 = vunpack.c.l.b16 %v217
    %v257 = vunpack.c.l.b16 %v218
    %v258 = vunpack.c.l.b16 %v219
    %v259 = vunpack.c.l.b16 %v220
    %v260 = vunpack.c.l.b16 %v221
    %v261 = vunpack.c.l.b16 %v222
    %v262 = vunpack.c.l.b16 %v223
    %v263 = vunpack.c.l.b16 %v224
    %v264 = vunpack.c.l.b16 %v225
    %v265 = vunpack.c.l.b16 %v226
    %v266 = vunpack.c.l.b16 %v227
    %v267 = vunpack.c.l.b16 %v228
    %v268 = vunpack.c.l.b16 %v229
    %v269 = vpack.c.b16 %v254, %v253
    %v270 = vpack.c.b16 %v256, %v255
    %v271 = vpack.c.b16 %v258, %v257
    %v272 = vpack.c.b16 %v260, %v259
    %v273 = vpack.c.b16 %v262, %v261
    %v274 = vpack.c.b16 %v264, %v263
    %v275 = vpack.c.b16 %v266, %v265
    %v276 = vpack.c.b16 %v268, %v267
    %285 = vmatprep.subr.bf16.mxu0 0
    %286 = vmatpush1.bf16.msra.mxu0 %v269
    %287 = vmatprep.subr.bf16.mxu0 0
    %288 = vmatpush1.bf16.msra.mxu0 %v270
    %289 = vmatprep.subr.bf16.mxu0 0
    %290 = vmatpush1.bf16.msra.mxu0 %v271
    %291 = vmatprep.subr.bf16.mxu0 0
    %292 = vmatpush1.bf16.msra.mxu0 %v272
    %293 = vmatprep.subr.bf16.mxu0 0
    %294 = vmatpush1.bf16.msra.mxu0 %v273
    %295 = vmatprep.subr.bf16.mxu0 0
    %296 = vmatpush1.bf16.msra.mxu0 %v274
    %297 = vmatprep.subr.bf16.mxu0 0
    %298 = vmatpush1.bf16.msra.mxu0 %v275
    %299 = vmatprep.subr.bf16.mxu0 0
    %300 = vmatpush1.bf16.msra.mxu0 %v276
    %301 = vmatprep.subr.bf16.mxu0 0
    %302 = vmatpush1.bf16.msra.mxu0 0
    %303 = vmatprep.subr.bf16.mxu0 0
    %304 = vmatpush1.bf16.msra.mxu0 0
    %305 = vmatprep.subr.bf16.mxu0 0
    %306 = vmatpush1.bf16.msra.mxu0 0
    %307 = vmatprep.subr.bf16.mxu0 0
    %308 = vmatpush1.bf16.msra.mxu0 0
    %309 = vmatprep.subr.bf16.mxu0 0
    %310 = vmatpush1.bf16.msra.mxu0 0
    %311 = vmatprep.subr.bf16.mxu0 0
    %312 = vmatpush1.bf16.msra.mxu0 0
    %313 = vmatprep.subr.bf16.mxu0 0
    %314 = vmatpush1.bf16.msra.mxu0 0
    %315 = vmatprep.subr.bf16.mxu0 0
    %316 = vmatpush1.bf16.msra.mxu0 0
    %317 = vmatprep.mubr.bf16.mxu0 0
    %318 = vmatmul.mubr.bf16.gmra.mrb[0].mxu0 %v213
    %v319 = vpop.f32.mrb[0].mxu0
    %v320 = vadd.f32 %v235, %v319
    %v321 = vpop.f32.mrb[0].mxu0
    %v322 = vpop.f32.mrb[0].mxu0
    %v323 = vadd.f32 %v235, %v322
    %v324 = vpop.f32.mrb[0].mxu0
    %325 = vdwg.mxu0
    %v326 = vmax.f32 %v320, 0.0
    %v327 = vmax.f32 %v323, 0.0
    %v328 = vpack.c.bf16 %v327, %v326
    %v329 = vld [vmem:[#allocation6] sm:$0xf]
    %v330 = vld [vmem:[#allocation6 + $0x4] sm:$0xf]
    %v331 = vld [vmem:[#allocation6 + $0x8] sm:$0xf]
    %v332 = vld [vmem:[#allocation6 + $0xc] sm:$0xf]
    %v333 = vld [vmem:[#allocation6 + $0x10] sm:$0xf]
    %v334 = vld [vmem:[#allocation6 + $0x14] sm:$0xf]
    %v335 = vld [vmem:[#allocation6 + $0x18] sm:$0xf]
    %v336 = vld [vmem:[#allocation6 + $0x1c] sm:$0xf]
    %v337 = vld [vmem:[#allocation6 + $0x20] sm:$0xf]
    %v338 = vld [vmem:[#allocation6 + $0x24] sm:$0xf]
    %v339 = vld [vmem:[#allocation6 + $0x28] sm:$0xf]
    %v340 = vld [vmem:[#allocation6 + $0x2c] sm:$0xf]
    %v341 = vld [vmem:[#allocation6 + $0x30] sm:$0xf]
    %v342 = vld [vmem:[#allocation6 + $0x34] sm:$0xf]
    %v343 = vld [vmem:[#allocation6 + $0x38] sm:$0xf]
    %v344 = vld [vmem:[#allocation6 + $0x3c] sm:$0xf]
    %v345 = vld [vmem:[%s7] sm:$0x1]
    %v347 = vlaneseq
    %v348 = vshrl.u32 %v347, 7
    %v349 = vsub.s32 0, %v348
    %v350 = vrot.slane %v345, %v349
    %v368 = vunpack.c.l.b16 %v329
    %v369 = vunpack.c.l.b16 %v330
    %v370 = vunpack.c.l.b16 %v331
    %v371 = vunpack.c.l.b16 %v332
    %v372 = vunpack.c.l.b16 %v333
    %v373 = vunpack.c.l.b16 %v334
    %v374 = vunpack.c.l.b16 %v335
    %v375 = vunpack.c.l.b16 %v336
    %v376 = vunpack.c.l.b16 %v337
    %v377 = vunpack.c.l.b16 %v338
    %v378 = vunpack.c.l.b16 %v339
    %v379 = vunpack.c.l.b16 %v340
    %v380 = vunpack.c.l.b16 %v341
    %v381 = vunpack.c.l.b16 %v342
    %v382 = vunpack.c.l.b16 %v343
    %v383 = vunpack.c.l.b16 %v344
    %v384 = vpack.c.b16 %v369, %v368
    %v385 = vpack.c.b16 %v371, %v370
    %v386 = vpack.c.b16 %v373, %v372
    %v387 = vpack.c.b16 %v375, %v374
    %v388 = vpack.c.b16 %v377, %v376
    %v389 = vpack.c.b16 %v379, %v378
    %v390 = vpack.c.b16 %v381, %v380
    %v391 = vpack.c.b16 %v383, %v382
    %400 = vmatprep.subr.bf16.mxu0 0
    %401 = vmatpush1.bf16.msra.mxu0 %v384
    %402 = vmatprep.subr.bf16.mxu0 0
    %403 = vmatpush1.bf16.msra.mxu0 %v385
    %404 = vmatprep.subr.bf16.mxu0 0
    %405 = vmatpush1.bf16.msra.mxu0 %v386
    %406 = vmatprep.subr.bf16.mxu0 0
    %407 = vmatpush1.bf16.msra.mxu0 %v387
    %408 = vmatprep.subr.bf16.mxu0 0
    %409 = vmatpush1.bf16.msra.mxu0 %v388
    %410 = vmatprep.subr.bf16.mxu0 0
    %411 = vmatpush1.bf16.msra.mxu0 %v389
    %412 = vmatprep.subr.bf16.mxu0 0
    %413 = vmatpush1.bf16.msra.mxu0 %v390
    %414 = vmatprep.subr.bf16.mxu0 0
    %415 = vmatpush1.bf16.msra.mxu0 %v391
    %416 = vmatprep.subr.bf16.mxu0 0
    %417 = vmatpush1.bf16.msra.mxu0 0
    %418 = vmatprep.subr.bf16.mxu0 0
    %419 = vmatpush1.bf16.msra.mxu0 0
    %420 = vmatprep.subr.bf16.mxu0 0
    %421 = vmatpush1.bf16.msra.mxu0 0
    %422 = vmatprep.subr.bf16.mxu0 0
    %423 = vmatpush1.bf16.msra.mxu0 0
    %424 = vmatprep.subr.bf16.mxu0 0
    %425 = vmatpush1.bf16.msra.mxu0 0
    %426 = vmatprep.subr.bf16.mxu0 0
    %427 = vmatpush1.bf16.msra.mxu0 0
    %428 = vmatprep.subr.bf16.mxu0 0
    %429 = vmatpush1.bf16.msra.mxu0 0
    %430 = vmatprep.subr.bf16.mxu0 0
    %431 = vmatpush1.bf16.msra.mxu0 0
    %432 = vmatprep.mubr.bf16.mxu0 0
    %433 = vmatmul.mubr.bf16.gmra.mrb[0].mxu0 %v328
    %v434 = vpop.f32.mrb[0].mxu0
    %v435 = vadd.f32 %v350, %v434
    %v436 = vpop.f32.mrb[0].mxu0
    %v437 = vpop.f32.mrb[0].mxu0
    %v438 = vadd.f32 %v350, %v437
    %v439 = vpop.f32.mrb[0].mxu0
    %440 = vdwg.mxu0
    %v441 = vmax.f32 %v435, 0.0
    %v442 = vmax.f32 %v438, 0.0
    %v443 = vpack.c.bf16 %v442, %v441
    %v444 = vld [vmem:[#allocation7] sm:$0xf]
    %v445 = vld [vmem:[#allocation7 + $0x4] sm:$0xf]
    %v446 = vld [vmem:[#allocation7 + $0x8] sm:$0xf]
    %v447 = vld [vmem:[#allocation7 + $0xc] sm:$0xf]
    %v448 = vld [vmem:[#allocation7 + $0x10] sm:$0xf]
    %v449 = vld [vmem:[#allocation7 + $0x14] sm:$0xf]
    %v450 = vld [vmem:[#allocation7 + $0x18] sm:$0xf]
    %v451 = vld [vmem:[#allocation7 + $0x1c] sm:$0xf]
    %v452 = vld [vmem:[#allocation7 + $0x20] sm:$0xf]
    %v453 = vld [vmem:[#allocation7 + $0x24] sm:$0xf]
    %v454 = vld [vmem:[#allocation7 + $0x28] sm:$0xf]
    %v455 = vld [vmem:[#allocation7 + $0x2c] sm:$0xf]
    %v456 = vld [vmem:[#allocation7 + $0x30] sm:$0xf]
    %v457 = vld [vmem:[#allocation7 + $0x34] sm:$0xf]
    %v458 = vld [vmem:[#allocation7 + $0x38] sm:$0xf]
    %v459 = vld [vmem:[#allocation7 + $0x3c] sm:$0xf]
    %v460 = vld [vmem:[%s9] sm:$0x1]
    %v462 = vlaneseq
    %v463 = vshrl.u32 %v462, 7
    %v464 = vsub.s32 0, %v463
    %v465 = vrot.slane %v460, %v464
    %v483 = vunpack.c.l.b16 %v444
    %v484 = vunpack.c.l.b16 %v445
    %v485 = vunpack.c.l.b16 %v446
    %v486 = vunpack.c.l.b16 %v447
    %v487 = vunpack.c.l.b16 %v448
    %v488 = vunpack.c.l.b16 %v449
    %v489 = vunpack.c.l.b16 %v450
    %v490 = vunpack.c.l.b16 %v451
    %v491 = vunpack.c.l.b16 %v452
    %v492 = vunpack.c.l.b16 %v453
    %v493 = vunpack.c.l.b16 %v454
    %v494 = vunpack.c.l.b16 %v455
    %v495 = vunpack.c.l.b16 %v456
    %v496 = vunpack.c.l.b16 %v457
    %v497 = vunpack.c.l.b16 %v458
    %v498 = vunpack.c.l.b16 %v459
    %v499 = vpack.c.b16 %v484, %v483
    %v500 = vpack.c.b16 %v486, %v485
    %v501 = vpack.c.b16 %v488, %v487
    %v502 = vpack.c.b16 %v490, %v489
    %v503 = vpack.c.b16 %v492, %v491
    %v504 = vpack.c.b16 %v494, %v493
    %v505 = vpack.c.b16 %v496, %v495
    %v506 = vpack.c.b16 %v498, %v497
    %515 = vmatprep.subr.bf16.mxu0 0
    %516 = vmatpush1.bf16.msra.mxu0 %v499
    %517 = vmatprep.subr.bf16.mxu0 0
    %518 = vmatpush1.bf16.msra.mxu0 %v500
    %519 = vmatprep.subr.bf16.mxu0 0
    %520 = vmatpush1.bf16.msra.mxu0 %v501
    %521 = vmatprep.subr.bf16.mxu0 0
    %522 = vmatpush1.bf16.msra.mxu0 %v502
    %523 = vmatprep.subr.bf16.mxu0 0
    %524 = vmatpush1.bf16.msra.mxu0 %v503
    %525 = vmatprep.subr.bf16.mxu0 0
    %526 = vmatpush1.bf16.msra.mxu0 %v504
    %527 = vmatprep.subr.bf16.mxu0 0
    %528 = vmatpush1.bf16.msra.mxu0 %v505
    %529 = vmatprep.subr.bf16.mxu0 0
    %530 = vmatpush1.bf16.msra.mxu0 %v506
    %531 = vmatprep.subr.bf16.mxu0 0
    %532 = vmatpush1.bf16.msra.mxu0 0
    %533 = vmatprep.subr.bf16.mxu0 0
    %534 = vmatpush1.bf16.msra.mxu0 0
    %535 = vmatprep.subr.bf16.mxu0 0
    %536 = vmatpush1.bf16.msra.mxu0 0
    %537 = vmatprep.subr.bf16.mxu0 0
    %538 = vmatpush1.bf16.msra.mxu0 0
    %539 = vmatprep.subr.bf16.mxu0 0
    %540 = vmatpush1.bf16.msra.mxu0 0
    %541 = vmatprep.subr.bf16.mxu0 0
    %542 = vmatpush1.bf16.msra.mxu0 0
    %543 = vmatprep.subr.bf16.mxu0 0
    %544 = vmatpush1.bf16.msra.mxu0 0
    %545 = vmatprep.subr.bf16.mxu0 0
    %546 = vmatpush1.bf16.msra.mxu0 0
    %547 = vmatprep.mubr.bf16.mxu0 0
    %548 = vmatmul.mubr.bf16.gmra.mrb[0].mxu0 %v443
    %v549 = vpop.f32.mrb[0].mxu0
    %v550 = vadd.f32 %v465, %v549
    %v551 = vpop.f32.mrb[0].mxu0
    %v552 = vpop.f32.mrb[0].mxu0
    %v553 = vadd.f32 %v465, %v552
    %v554 = vpop.f32.mrb[0].mxu0
    %555 = vdwg.mxu0
    %v556 = vld [vmem:[%s1] sm:$0x1]
    %v557 = vsub.f32 1.0, %v556
    %v559 = vlaneseq
    %v560 = vshrl.u32 %v559, 7
    %v561 = vsub.s32 0, %v560
    %v562 = vrot.slane %v557, %v561
    %v564 = vmul.f32 %v550, %v562
    %v565 = vmul.f32 %v553, %v562
    %v566 = vtanh.pop %v564
    %v567 = vtanh.pop %v565
    %v568 = vsub.f32 1.0, %v566
    %v569 = vsub.f32 1.0, %v567
    %v571 = vlaneseq
    %v572 = vshrl.u32 %v571, 7
    %v573 = vsub.s32 0, %v572
    %v574 = vrot.slane %v556, %v573
    %v576 = vmul.f32 %v574, %v568
    %v577 = vmul.f32 %v574, %v569
    %v578 = vadd.f32 %v566, %v576
    %v579 = vadd.f32 %v567, %v577
    %580 = vst [vmem:[%s10] sm:$0xff] %v578
    %581 = vst [vmem:[%s10 + $0x8] sm:$0xff] %v579
    // Predicated region
    $region58: #{fwd.1} parent=1 // pred_check
      _
    $region59: #{fwd.1} parent=1 // pred_check_branch
      %583 = sbr.rel (0) target = $region61
    $region60: #{fwd.1} parent=1 // pred_region
      _
    $region61: #{fwd.1} parent=1 // pred_fallthru
      _
    // Predicated region
    $region62: #{fwd.1} parent=1 // pred_check
      _
    $region63: #{fwd.1} parent=1 // pred_check_branch
      %585 = sbr.rel (0) target = $region65
    $region64: #{fwd.1} parent=1 // pred_region
      _
    $region65: #{fwd.1} parent=1 // pred_fallthru
      _
    %586 = vsyncpa [#allocation3], 1
    %587 = vsyncpa [#allocation5], 1
    %588 = vsyncpa [#allocation8], 1

</llo_original>
